<compile_context>
chip_gen: v5e
topology: v5e:2x2
jax: 0.10.0
libtpu: 0.0.40
codegen_flags: <defaults>
</compile_context>

<pallas_src>
import math

import jax
import jax.numpy as jnp
from jax.experimental import pallas as pl
from jax.experimental.pallas import tpu as pltpu

EPS = 1e-5  # nn.InstanceNorm1d default eps


def _make_kernel(K: int, c_out: int, L: int):
    left = (K - 1) // 2          # Conv1dSame left pad for stride=1 (total pad = K-1)
    inv_len = 1.0 / L
    use_xlu_roll = (L % 128 == 0)  # pltpu.roll path only for lane-aligned widths

    def kernel(x_ref, wab_ref, w3_ref, o_ref):
        x = x_ref[...]            # (C_in, L): one sample, channels on sublanes

        if use_xlu_roll:
            # tap-validity masks ('same' zero padding), built from an in-kernel iota —
            # nothing shipped through HBM.
            pos = jax.lax.broadcasted_iota(jnp.int32, (1, L), 1)
            masks = {
                k: ((pos >= -(k - left)) & (pos < L - (k - left))).astype(jnp.float32)
                for k in range(K) if k != left
            }

        def taps(v):
            # v: (R, L) -> (K*R, L). Row block k holds v[:, l + (k - left)] with
            # Conv1dSame zero padding at out-of-range positions.
            pieces = []
            for k in range(K):
                d = k - left
                if d == 0:
                    pieces.append(v)
                elif use_xlu_roll:
                    # XLU lane rotate (free slot) + 0/1 mask for the wrapped lanes.
                    pieces.append(pltpu.roll(v, (-d) % L, axis=1) * masks[k])
                else:
                    # unaligned / toy lane widths: zero-filled shift via static
                    # slice + concat (proven lowering; zeros ARE the 'same' padding).
                    pad = jnp.zeros((v.shape[0], abs(d)), v.dtype)
                    if d > 0:
                        pieces.append(jnp.concatenate([v[:, d:], pad], axis=1))
                    else:
                        pieces.append(jnp.concatenate([pad, v[:, :d]], axis=1))
            return jnp.concatenate(pieces, axis=0)

        def inst_norm(y):
            # InstanceNorm1d (no affine, biased variance, eps=1e-5): per-row mean/var
            # over the lane (length) axis -> XLU reduce + lane broadcast, no matmuls.
            mean = jnp.sum(y, axis=-1, keepdims=True) * inv_len
            cent = y - mean
            var = jnp.sum(cent * cent, axis=-1, keepdims=True) * inv_len
            return cent * jax.lax.rsqrt(var + EPS)

        # conv_a + conv_b fused into one MXU dot (contraction = K*C_in), then norm1.
        # Conv biases are dropped: a per-channel constant before affine-free
        # InstanceNorm is cancelled exactly by the mean subtraction.
        ab = inst_norm(jnp.dot(wab_ref[...], taps(x),
                               preferred_element_type=jnp.float32))      # (2*C_out, L)

        # gate A * sigmoid(B): exp + approximate reciprocal ride the EUP slot.
        a = ab[:c_out]
        b = ab[c_out:]
        g = a * pl.reciprocal(1.0 + jnp.exp(-b), approx=True)            # (C_out, L)

        # second conv (C_out -> C_out//2) as one dot (contraction = K*C_out) + norm2.
        out = inst_norm(jnp.dot(w3_ref[...], taps(g),
                                preferred_element_type=jnp.float32))     # (C_half, L)

        # residual add (module requires out_channels//2 == in_channels).
        o_ref[...] = (x + out).astype(o_ref.dtype)

    return kernel


@jax.jit
def residual_block(x, w_a, b_a, w_b, b_b, w_c, b_c):
    """ResidualBlock forward.

    x        : (N, C_in, L) f32
    w_a, w_b : (C_out, C_in, K), b_a, b_b : (C_out,)      -- conv_a / conv_b
    w_c      : (C_out//2, C_out, K), b_c  : (C_out//2,)   -- second conv
    Only stride=1 (the Conv1d default) is supported: the module's own `x + out`
    residual requires it. The conv biases are accepted for API fidelity but are
    mathematically cancelled by the affine-free InstanceNorm that follows each conv,
    so they are not shipped to the kernel.
    """
    N, C_in, L = x.shape
    C_out, _, K = w_a.shape
    C_half = w_c.shape[0]
    if C_half != C_in:
        raise ValueError("residual add requires out_channels // 2 == in_channels")
    f32 = jnp.float32

    # packed conv weights: column index = k*C_in + c (matches tap row stacking order)
    wab = jnp.concatenate(
        [jnp.transpose(w_a, (0, 2, 1)).reshape(C_out, K * C_in),
         jnp.transpose(w_b, (0, 2, 1)).reshape(C_out, K * C_in)],
        axis=0).astype(f32)                                   # (2*C_out, K*C_in)
    w3 = jnp.transpose(w_c, (0, 2, 1)).reshape(C_half, K * C_out).astype(f32)

    out = pl.pallas_call(
        _make_kernel(K, C_out, L),
        out_shape=jax.ShapeDtypeStruct((N, C_half, L), f32),
        grid=(N,),  # one sample per step; activations streamed, weights resident
        in_specs=[
            pl.BlockSpec((pl.Squeezed(), C_in, L), lambda n: (n, 0, 0)),
            pl.BlockSpec((2 * C_out, K * C_in), lambda n: (0, 0)),
            pl.BlockSpec((C_half, K * C_out), lambda n: (0, 0)),
        ],
        out_specs=pl.BlockSpec((pl.Squeezed(), C_half, L), lambda n: (n, 0, 0)),
        compiler_params=pltpu.CompilerParams(
            # batch axis shards across the two v7x TensorCores; no-op on v5e/v6e.
            dimension_semantics=("parallel",)),
    )(x.astype(f32), wab, w3)

    return out.astype(x.dtype)


def reference(x, w_a, b_a, w_b, b_b, w_c, b_c):
    """Pure-JAX mirror of the PyTorch ResidualBlock (for the correctness check)."""
    def conv_same(z, w, b):
        L = z.shape[-1]
        k = w.shape[-1]
        pad = max((math.ceil(L / 1) - 1) * 1 + (k - 1) + 1 - L, 0)
        zp = jnp.pad(z, ((0, 0), (0, 0), (pad // 2, pad - pad // 2)))
        y = jax.lax.conv_general_dilated(
            zp, w, window_strides=(1,), padding="VALID",
            dimension_numbers=("NCH", "OIH", "NCH"),
            precision=jax.lax.Precision.HIGHEST)
        return y + b[None, :, None]

    def inorm(y):
        m = y.mean(-1, keepdims=True)
        v = ((y - m) ** 2).mean(-1, keepdims=True)
        return (y - m) / jnp.sqrt(v + EPS)

    A = inorm(conv_same(x, w_a, b_a))
    B = inorm(conv_same(x, w_b, b_b))
    gated = A * jax.nn.sigmoid(B)
    out = inorm(conv_same(gated, w_c, b_c))
    return x + out


if __name__ == "__main__":
    # ResidualBlock(in_channels=4, out_channels=8, kernel_size=3); stride=1 (Conv1d
    # default) and out_channels//2 == in_channels, as required by the residual add.
    N, C_IN, C_OUT, L, K = 2, 4, 8, 16, 3
    C_HALF = C_OUT // 2

    key = jax.random.PRNGKey(0)
    kx, ka, kab, kb, kbb, kc, kcb = jax.random.split(key, 7)

    bound1 = 1.0 / math.sqrt(C_IN * K)    # PyTorch Conv1d default init bound
    bound2 = 1.0 / math.sqrt(C_OUT * K)
    w_a = jax.random.uniform(ka, (C_OUT, C_IN, K), jnp.float32, -bound1, bound1)
    b_a = jax.random.uniform(kab, (C_OUT,), jnp.float32, -bound1, bound1)
    w_b = jax.random.uniform(kb, (C_OUT, C_IN, K), jnp.float32, -bound1, bound1)
    b_b = jax.random.uniform(kbb, (C_OUT,), jnp.float32, -bound1, bound1)
    w_c = jax.random.uniform(kc, (C_HALF, C_OUT, K), jnp.float32, -bound2, bound2)
    b_c = jax.random.uniform(kcb, (C_HALF,), jnp.float32, -bound2, bound2)
    x = jax.random.normal(kx, (N, C_IN, L), dtype=jnp.float32)

    out = jax.block_until_ready(residual_block(x, w_a, b_a, w_b, b_b, w_c, b_c))
    ref = jax.block_until_ready(reference(x, w_a, b_a, w_b, b_b, w_c, b_c))

    assert out.shape == x.shape, out.shape
    err = float(jnp.max(jnp.abs(out - ref)))
    # Tolerance covers the default Mosaic f32 matmul precision and the approximate
    # (EUP) reciprocal used in the sigmoid gate.
    assert jnp.allclose(out, ref, atol=5e-3, rtol=5e-3), err
    print("KERNEL_OK")
</pallas_src>

<mosaic_0001>
module attributes {stable_mosaic.version = 11 : i64} {
  func.func @kernel(%arg0: i32, %arg1: memref<1x4x16xf32, #tpu.memory_space<vmem>>, %arg2: memref<16x12xf32, #tpu.memory_space<vmem>>, %arg3: memref<4x24xf32, #tpu.memory_space<vmem>>, %arg4: memref<1x4x16xf32, #tpu.memory_space<vmem>>) attributes {dimension_semantics = [#tpu.dimension_semantics<parallel>], iteration_bounds = array<i64: 2>, scalar_prefetch = 0 : i64, scratch_operands = 0 : i64, tpu.core_type = #tpu.core_type<tc>, window_params = [{transform_indices = @transform_0, window_bounds = array<i64: 1, 4, 16>}, {pipeline_mode = #tpu.pipeline_mode<synchronous>, transform_indices = @transform_1, window_bounds = array<i64: 16, 12>}, {pipeline_mode = #tpu.pipeline_mode<synchronous>, transform_indices = @transform_2, window_bounds = array<i64: 4, 24>}, {transform_indices = @transform_3, window_bounds = array<i64: 1, 4, 16>}]} {
    %c0 = arith.constant 0 : index
    %c0_0 = arith.constant 0 : index
    %c0_1 = arith.constant 0 : index
    %0 = vector.load %arg1[%c0, %c0_0, %c0_1] : memref<1x4x16xf32, #tpu.memory_space<vmem>>, vector<1x4x16xf32>
    %1 = vector.shape_cast %0 : vector<1x4x16xf32> to vector<4x16xf32>
    %c0_2 = arith.constant 0 : index
    %c0_3 = arith.constant 0 : index
    %2 = vector.load %arg2[%c0_2, %c0_3] : memref<16x12xf32, #tpu.memory_space<vmem>>, vector<16x12xf32>
    %cst = arith.constant 0.000000e+00 : f32
    %3 = vector.broadcast %cst : f32 to vector<4x1xf32>
    %4 = vector.extract_strided_slice %1 {offsets = [0, 0], sizes = [4, 15], strides = [1, 1]} : vector<4x16xf32> to vector<4x15xf32>
    %5 = tpu.concatenate %3, %4 in 1 : vector<4x1xf32>, vector<4x15xf32> -> vector<4x16xf32>
    %cst_4 = arith.constant 0.000000e+00 : f32
    %6 = vector.broadcast %cst_4 : f32 to vector<4x1xf32>
    %7 = vector.extract_strided_slice %1 {offsets = [0, 1], sizes = [4, 15], strides = [1, 1]} : vector<4x16xf32> to vector<4x15xf32>
    %8 = tpu.concatenate %7, %6 in 1 : vector<4x15xf32>, vector<4x1xf32> -> vector<4x16xf32>
    %9 = tpu.concatenate %5, %1, %8 in 0 : vector<4x16xf32>, vector<4x16xf32>, vector<4x16xf32> -> vector<12x16xf32>
    %cst_5 = arith.constant dense<0.000000e+00> : vector<16x16xf32>
    %10 = tpu.matmul %2, %9, %cst_5 {dimension_numbers = #tpu.dot_dimension_numbers<[1], [0], [0], [1], [0, 0, 1, 1], [], []>} : vector<16x12xf32>, vector<12x16xf32>, vector<16x16xf32> -> vector<16x16xf32>
    %cst_6 = arith.constant dense<0.000000e+00> : vector<16xf32>
    %11 = vector.multi_reduction <add>, %10, %cst_6 [1] : vector<16x16xf32> to vector<16xf32>
    %12 = vector.shape_cast %11 : vector<16xf32> to vector<16x1xf32>
    %cst_7 = arith.constant 6.250000e-02 : f32
    %13 = vector.broadcast %cst_7 : f32 to vector<16x1xf32>
    %14 = arith.mulf %12, %13 : vector<16x1xf32>
    %15 = vector.broadcast %14 : vector<16x1xf32> to vector<16x16xf32>
    %16 = arith.subf %10, %15 : vector<16x16xf32>
    %17 = arith.mulf %16, %16 : vector<16x16xf32>
    %cst_8 = arith.constant dense<0.000000e+00> : vector<16xf32>
    %18 = vector.multi_reduction <add>, %17, %cst_8 [1] : vector<16x16xf32> to vector<16xf32>
    %19 = vector.shape_cast %18 : vector<16xf32> to vector<16x1xf32>
    %cst_9 = arith.constant 6.250000e-02 : f32
    %20 = vector.broadcast %cst_9 : f32 to vector<16x1xf32>
    %21 = arith.mulf %19, %20 : vector<16x1xf32>
    %cst_10 = arith.constant 9.99999974E-6 : f32
    %22 = vector.broadcast %cst_10 : f32 to vector<16x1xf32>
    %23 = arith.addf %21, %22 : vector<16x1xf32>
    %24 = math.rsqrt %23 : vector<16x1xf32>
    %25 = vector.broadcast %24 : vector<16x1xf32> to vector<16x16xf32>
    %26 = arith.mulf %16, %25 : vector<16x16xf32>
    %27 = vector.extract_strided_slice %26 {offsets = [0, 0], sizes = [8, 16], strides = [1, 1]} : vector<16x16xf32> to vector<8x16xf32>
    %28 = vector.extract_strided_slice %26 {offsets = [8, 0], sizes = [8, 16], strides = [1, 1]} : vector<16x16xf32> to vector<8x16xf32>
    %cst_11 = arith.constant 0.000000e+00 : f32
    %29 = vector.broadcast %cst_11 : f32 to vector<8x16xf32>
    %30 = arith.subf %29, %28 : vector<8x16xf32>
    %31 = math.exp %30 : vector<8x16xf32>
    %cst_12 = arith.constant 1.000000e+00 : f32
    %32 = vector.broadcast %cst_12 : f32 to vector<8x16xf32>
    %33 = arith.addf %32, %31 : vector<8x16xf32>
    %34 = tpu.reciprocal %33 {approx = true} : vector<8x16xf32> -> vector<8x16xf32>
    %35 = arith.mulf %27, %34 : vector<8x16xf32>
    %c0_13 = arith.constant 0 : index
    %c0_14 = arith.constant 0 : index
    %36 = vector.load %arg3[%c0_13, %c0_14] : memref<4x24xf32, #tpu.memory_space<vmem>>, vector<4x24xf32>
    %cst_15 = arith.constant 0.000000e+00 : f32
    %37 = vector.broadcast %cst_15 : f32 to vector<8x1xf32>
    %38 = vector.extract_strided_slice %35 {offsets = [0, 0], sizes = [8, 15], strides = [1, 1]} : vector<8x16xf32> to vector<8x15xf32>
    %39 = tpu.concatenate %37, %38 in 1 : vector<8x1xf32>, vector<8x15xf32> -> vector<8x16xf32>
    %cst_16 = arith.constant 0.000000e+00 : f32
    %40 = vector.broadcast %cst_16 : f32 to vector<8x1xf32>
    %41 = vector.extract_strided_slice %35 {offsets = [0, 1], sizes = [8, 15], strides = [1, 1]} : vector<8x16xf32> to vector<8x15xf32>
    %42 = tpu.concatenate %41, %40 in 1 : vector<8x15xf32>, vector<8x1xf32> -> vector<8x16xf32>
    %43 = tpu.concatenate %39, %35, %42 in 0 : vector<8x16xf32>, vector<8x16xf32>, vector<8x16xf32> -> vector<24x16xf32>
    %cst_17 = arith.constant dense<0.000000e+00> : vector<4x16xf32>
    %44 = tpu.matmul %36, %43, %cst_17 {dimension_numbers = #tpu.dot_dimension_numbers<[1], [0], [0], [1], [0, 0, 1, 1], [], []>} : vector<4x24xf32>, vector<24x16xf32>, vector<4x16xf32> -> vector<4x16xf32>
    %cst_18 = arith.constant dense<0.000000e+00> : vector<4xf32>
    %45 = vector.multi_reduction <add>, %44, %cst_18 [1] : vector<4x16xf32> to vector<4xf32>
    %46 = vector.shape_cast %45 : vector<4xf32> to vector<4x1xf32>
    %cst_19 = arith.constant 6.250000e-02 : f32
    %47 = vector.broadcast %cst_19 : f32 to vector<4x1xf32>
    %48 = arith.mulf %46, %47 : vector<4x1xf32>
    %49 = vector.broadcast %48 : vector<4x1xf32> to vector<4x16xf32>
    %50 = arith.subf %44, %49 : vector<4x16xf32>
    %51 = arith.mulf %50, %50 : vector<4x16xf32>
    %cst_20 = arith.constant dense<0.000000e+00> : vector<4xf32>
    %52 = vector.multi_reduction <add>, %51, %cst_20 [1] : vector<4x16xf32> to vector<4xf32>
    %53 = vector.shape_cast %52 : vector<4xf32> to vector<4x1xf32>
    %cst_21 = arith.constant 6.250000e-02 : f32
    %54 = vector.broadcast %cst_21 : f32 to vector<4x1xf32>
    %55 = arith.mulf %53, %54 : vector<4x1xf32>
    %cst_22 = arith.constant 9.99999974E-6 : f32
    %56 = vector.broadcast %cst_22 : f32 to vector<4x1xf32>
    %57 = arith.addf %55, %56 : vector<4x1xf32>
    %58 = math.rsqrt %57 : vector<4x1xf32>
    %59 = vector.broadcast %58 : vector<4x1xf32> to vector<4x16xf32>
    %60 = arith.mulf %50, %59 : vector<4x16xf32>
    %61 = arith.addf %1, %60 : vector<4x16xf32>
    %c0_23 = arith.constant 0 : index
    %c0_24 = arith.constant 0 : index
    %c0_25 = arith.constant 0 : index
    %62 = vector.load %arg4[%c0_23, %c0_24, %c0_25] : memref<1x4x16xf32, #tpu.memory_space<vmem>>, vector<1x4x16xf32>
    %63 = vector.shape_cast %62 : vector<1x4x16xf32> to vector<4x16xf32>
    %64 = vector.shape_cast %61 : vector<4x16xf32> to vector<1x4x16xf32>
    tpu.vector_store %arg4[%c0_23, %c0_24, %c0_25], %64 {strides = array<i32>} : memref<1x4x16xf32, #tpu.memory_space<vmem>>, vector<1x4x16xf32>,
    return
  }
  func.func @transform_0(%arg0: i32) -> (i32, i32, i32) {
    %c0_i32 = arith.constant 0 : i32
    %c0_i32_0 = arith.constant 0 : i32
    %c0_i32_1 = arith.constant 0 : i32
    return %arg0, %c0_i32, %c0_i32_0 : i32, i32, i32
  }
  func.func @transform_1(%arg0: i32) -> (i32, i32) {
    %c0_i32 = arith.constant 0 : i32
    %c0_i32_0 = arith.constant 0 : i32
    %c0_i32_1 = arith.constant 0 : i32
    return %c0_i32, %c0_i32_0 : i32, i32
  }
  func.func @transform_2(%arg0: i32) -> (i32, i32) {
    %c0_i32 = arith.constant 0 : i32
    %c0_i32_0 = arith.constant 0 : i32
    %c0_i32_1 = arith.constant 0 : i32
    return %c0_i32, %c0_i32_0 : i32, i32
  }
  func.func @transform_3(%arg0: i32) -> (i32, i32, i32) {
    %c0_i32 = arith.constant 0 : i32
    %c0_i32_0 = arith.constant 0 : i32
    %c0_i32_1 = arith.constant 0 : i32
    return %arg0, %c0_i32, %c0_i32_0 : i32, i32, i32
  }
}

</mosaic_0001>

<llo_original>
// kernel: residual_block.1
$region0: #{residual_block.1}
  #allocation0 [shape = 'u32[]', space=smem, size = 0x4, offset = 0x4, fixed_abs, tag = 'smem constant byte address 0x4 - core index']
  #allocation1 [shape = 'u32[72,128]{1,0:T(1,128)}', space=vmem, size = 0x9000, scoped, tag = 'internal scratch']
  %s0 = inlined_call_operand.vmem [shape: f32[2,4,16], index: 0, kind: input, shape index: {}]
  %s1 = inlined_call_operand.vmem [shape: f32[16,12], index: 1, kind: input, shape index: {}]
  %s2 = inlined_call_operand.vmem [shape: f32[4,24], index: 2, kind: input, shape index: {}]
  %s3 = inlined_call_operand.hbm [shape: f32[2,4,16], index: 3, kind: output, shape index: {}]
  %s4 = sld [smem:[#allocation0]]
  $region45: #{residual_block.1} parent=0
    _
  %s6 = ssub.s32 1, %s4
  %s7 = scalar_select 0, %s6, %s4
  $region1: #{residual_block.1} parent=0
    #allocation2 [shape = 'u8[4096]{0}', space=vmem, size = 0x1000, scoped, tag = 'output window, operand 0']
    #allocation3 [shape = 's32[2]{0}', space=sflag, size = 0x8, scoped, tag = 'scoped memory for residual_block.1']
    %8 = vsyncpa [#allocation3], 0
    %s9 = scalar_lea.sflag [#allocation3], 1
    %10 = vsyncpa %s9, 0
    loop: start=0, step=1, limit=4
    $region2: #{residual_block.1} parent=1 // loop_pre_header
      _
    $region3: #{residual_block.1} parent=1 // loop_header
      %s12 = sphi 0, %s16
      %p13 = scmp.ge.s32.totalorder %s12, 4
      %s22 = sphi 0, %s24
      %s25 = sphi 0, %s22
      %s26 = sphi 0, %s25
      %s42 = sphi 0, %s26
      %s46 = sphi 0, %s46
      %s48 = sphi 0, %s46
      %s49 = sphi 0, %s48
      %s63 = sphi 0, %s49
      %s67 = sphi 0, %s67
      %s69 = sphi 0, %s67
      %s70 = sphi 0, %s69
      %s84 = sphi 0, %s70
      %s90 = sphi 0, %s92
      %s93 = sphi 0, %s90
      %s94 = sphi 0, %s93
      %s110 = sphi 0, %s94
    $region4: #{residual_block.1} parent=1 // loop_header_branch
      %15 = sbr.rel (%p13) target = $region8
    $region5: #{residual_block.1} parent=1 // loop_body
      %s17 = ssub.s32 %s12, 1
      %s18 = ssub.s32 %s12, 2
      %s19 = sadd.s32 %s12, 1
      %s20 = ssub.s32 %s12, %s19
      %p21 = scmp.eq.s32.totalorder %s20, 0
      %s23 = sadd.s32 %s22, 1
      %s24 = scalar_select %p21, %s22, %s23
      %p27 = pneg %p21
      %p28 = scmp.eq.s32.totalorder %s12, 1
      %p29 = por %p27, %p28
      %p30 = scmp.ne.s32.totalorder %s22, %s25
      %p31 = scmp.eq.s32.totalorder %s12, 0
      %p32 = por %p30, %p31
      %p33 = scmp.ne.s32.totalorder %s22, %s25
      %p34 = scmp.eq.s32.totalorder %s17, 1
      %p35 = por %p33, %p34
      %p36 = scmp.ne.s32.totalorder %s25, %s26
      %p37 = scmp.eq.s32.totalorder %s17, 0
      %p38 = por %p36, %p37
      %p39 = scmp.ne.s32.totalorder %s25, %s26
      %p40 = scmp.eq.s32.totalorder %s18, 1
      %p41 = por %p39, %p40
      %p43 = scmp.ne.s32.totalorder %s26, %s42
      %p44 = scmp.eq.s32.totalorder %s18, 0
      %p45 = por %p43, %p44
      %s47 = sadd.s32 %s46, 1
      %p50 = scmp.eq.s32.totalorder %s12, 1
      %p51 = scmp.ne.s32.totalorder %s46, %s48
      %p52 = scmp.eq.s32.totalorder %s12, 0
      %p53 = por %p51, %p52
      %p54 = scmp.ne.s32.totalorder %s46, %s48
      %p55 = scmp.eq.s32.totalorder %s17, 1
      %p56 = por %p54, %p55
      %p57 = scmp.ne.s32.totalorder %s48, %s49
      %p58 = scmp.eq.s32.totalorder %s17, 0
      %p59 = por %p57, %p58
      %p60 = scmp.ne.s32.totalorder %s48, %s49
      %p61 = scmp.eq.s32.totalorder %s18, 1
      %p62 = por %p60, %p61
      %p64 = scmp.ne.s32.totalorder %s49, %s63
      %p65 = scmp.eq.s32.totalorder %s18, 0
      %p66 = por %p64, %p65
      %s68 = sadd.s32 %s67, 1
      %p71 = scmp.eq.s32.totalorder %s12, 1
      %p72 = scmp.ne.s32.totalorder %s67, %s69
      %p73 = scmp.eq.s32.totalorder %s12, 0
      %p74 = por %p72, %p73
      %p75 = scmp.ne.s32.totalorder %s67, %s69
      %p76 = scmp.eq.s32.totalorder %s17, 1
      %p77 = por %p75, %p76
      %p78 = scmp.ne.s32.totalorder %s69, %s70
      %p79 = scmp.eq.s32.totalorder %s17, 0
      %p80 = por %p78, %p79
      %p81 = scmp.ne.s32.totalorder %s69, %s70
      %p82 = scmp.eq.s32.totalorder %s18, 1
      %p83 = por %p81, %p82
      %p85 = scmp.ne.s32.totalorder %s70, %s84
      %p86 = scmp.eq.s32.totalorder %s18, 0
      %p87 = por %p85, %p86
      %s88 = ssub.s32 %s12, %s19
      %p89 = scmp.eq.s32.totalorder %s88, 0
      %s91 = sadd.s32 %s90, 1
      %s92 = scalar_select %p89, %s90, %s91
      %p95 = pneg %p89
      %p96 = scmp.eq.s32.totalorder %s12, 1
      %p97 = por %p95, %p96
      %p98 = scmp.ne.s32.totalorder %s90, %s93
      %p99 = scmp.eq.s32.totalorder %s12, 0
      %p100 = por %p98, %p99
      %p101 = scmp.ne.s32.totalorder %s90, %s93
      %p102 = scmp.eq.s32.totalorder %s17, 1
      %p103 = por %p101, %p102
      %p104 = scmp.ne.s32.totalorder %s93, %s94
      %p105 = scmp.eq.s32.totalorder %s17, 0
      %p106 = por %p104, %p105
      %p107 = scmp.ne.s32.totalorder %s93, %s94
      %p108 = scmp.eq.s32.totalorder %s18, 1
      %p109 = por %p107, %p108
      %p111 = scmp.ne.s32.totalorder %s94, %s110
      %p112 = scmp.eq.s32.totalorder %s18, 0
      %p113 = por %p111, %p112
      %p114 = scmp.le.s32.totalorder 1, %s12
      %p115 = scmp.lt.s32.totalorder %s12, 3
      %p116 = pnand %p114, %p115
      %p117 = pneg %p116
      // Predicated region
      $region9: #{residual_block.1} parent=5 // pred_check
        _
      $region10: #{residual_block.1} parent=5 // pred_check_branch
        %119 = sbr.rel (%p116) target = $region12
      $region11: #{residual_block.1} parent=5 // pred_region
        %s120 = ssub.s32 %s12, 1
        // Predicated region
        $region13: #{residual_block.1} parent=11 // pred_check
          %p121 = pneg %p59
        $region14: #{residual_block.1} parent=11 // pred_check_branch
          %123 = sbr.rel (%p121) target = $region16
        $region15: #{residual_block.1} parent=11 // pred_region
          _
        $region16: #{residual_block.1} parent=11 // pred_fallthru
          _
        // Predicated region
        $region17: #{residual_block.1} parent=11 // pred_check
          %p124 = pneg %p80
        $region18: #{residual_block.1} parent=11 // pred_check_branch
          %126 = sbr.rel (%p124) target = $region20
        $region19: #{residual_block.1} parent=11 // pred_region
          _
        $region20: #{residual_block.1} parent=11 // pred_fallthru
          _
      $region12: #{residual_block.1} parent=5 // pred_fallthru
        _
      %p127 = scmp.lt.s32.totalorder %s12, 2
      // Predicated region
      $region21: #{residual_block.1} parent=5 // pred_check
        %p128 = pneg %p127
      $region22: #{residual_block.1} parent=5 // pred_check_branch
        %130 = sbr.rel (%p128) target = $region24
      $region23: #{residual_block.1} parent=5 // pred_region
        // Predicated region
        $region25: #{residual_block.1} parent=23 // pred_check
          %p131 = pneg %p32
        $region26: #{residual_block.1} parent=23 // pred_check_branch
          %133 = sbr.rel (%p131) target = $region28
        $region27: #{residual_block.1} parent=23 // pred_region
          %p134 = scmp.lt.s32.totalorder %s12, 1
          %s135 = scalar_select %p134, %s12, 1
          %s136 = smul.addr %s135, 4
          %s137 = scalar_lea.vmem %s0, %s136
        $region28: #{residual_block.1} parent=23 // pred_fallthru
          _
      $region24: #{residual_block.1} parent=5 // pred_fallthru
        _
      %p138 = scmp.le.s32.totalorder 1, %s12
      %p139 = scmp.lt.s32.totalorder %s12, 3
      %p140 = pnand %p138, %p139
      %p141 = pneg %p140
      // Predicated region
      $region29: #{residual_block.1} parent=5 // pred_check
        _
      $region30: #{residual_block.1} parent=5 // pred_check_branch
        %143 = sbr.rel (%p140) target = $region32
      $region31: #{residual_block.1} parent=5 // pred_region
        %s144 = ssub.s32 %s12, 1
        %p145 = scmp.lt.s32.totalorder %s17, 1
        %s146 = scalar_select %p145, %s17, 1
        %s147 = smul.addr %s146, 4
        %s148 = scalar_lea.vmem %s0, %s147
        %p149 = pneg %p38
        %p150 = pneg %p35
        %p151 = pneg %p59
        %p152 = pneg %p56
        %p153 = pneg %p80
        %p154 = pneg %p77
        %p155 = pneg %p106
        %p156 = pneg %p103
        %s157 = sand.u32 %s93, 1
        %s158 = scalar_lea.sflag [#allocation3], %s157
        %s159 = sand.u32 %s93, 1
        %s160 = smul.addr %s159, 4
        %s161 = scalar_lea.vmem [#allocation2], %s160
        %p162 = scmp.lt.s32.totalorder %s17, 1
        %s163 = scalar_select %p162, %s17, 1
        %s164 = smul.addr %s163, 4
        %s165 = scalar_lea.vmem %s0, %s164
        %v166 = vld [vmem:[%s165] sm:$0xf]
        %v167 = vld [vmem:[%s1] sm:$0xff]
        %v168 = vld [vmem:[%s1 + $0x8] sm:$0xff]
        %170 = vrot.lane.b32.xlu0 %v166, 1
        %v171 = vpop.permute.xlu0 %170
        %vm173 = vcmask 7168
        %v174 = vsel %vm173, 0.0, %v171
        %175 = vrot.lane.b32.xlu0 %v166, 127
        %v176 = vpop.permute.xlu0 %175
        %vm178 = vcmask 121856
        %v179 = vsel %vm178, %v176, 0.0
        %v180 = vrot.slane %v166, 4
        %vm182 = vcmask 1043456
        %v183 = vsel %vm182, %v174, %v180
        %vm184 = vcmask 97280
        %v186 = vsel %vm184, %v167, 0
        %v189 = vsel %vm184, %v168, 0
        %v192 = vsel %vm182, %v179, 0
        %194 = vmatpush.msra.mxu0 0.0
        %195 = vmatpush.msra.mxu0 0.0
        %196 = vmatpush.msra.mxu0 0.0
        %197 = vmatpush.msra.mxu0 0.0
        %198 = vmatpush.msra.mxu0 0.0
        %199 = vmatpush.msra.mxu0 0.0
        %200 = vmatpush.msra.mxu0 0.0
        %201 = vmatpush.msra.mxu0 0.0
        %202 = vmatpush.msra.mxu0 0.0
        %203 = vmatpush.msra.mxu0 0.0
        %204 = vmatpush.msra.mxu0 0.0
        %205 = vmatpush.msra.mxu0 0.0
        %206 = vmatpush.msra.mxu0 0.0
        %207 = vmatpush.msra.mxu0 0.0
        %208 = vmatpush.msra.mxu0 %v192
        %209 = vmatpush.msra.mxu0 %v183
        %210 = vmatmul.f32.gmra.mxu0 %v186
        %v211 = vpop.f32.mrf.mxu0
        %v212 = vadd.f32 0.0, %v211
        %213 = vmatmul.f32.gmra.mxu0 %v189
        %v214 = vpop.f32.mrf.mxu0
        %v215 = vadd.f32 0.0, %v214
        %216 = vdwg.mxu0
        %vm217 = vcmask 130048
        %v218 = vsel %vm217, %v212, 0.0
        %219 = vadd.xlane.f32.xlu0 %v218
        %v220 = vpop.xlane.xlu0 %219
        %v221 = vsel %vm217, %v215, 0.0
        %222 = vadd.xlane.f32.xlu0 %v221
        %v223 = vpop.xlane.xlu0 %222
        %v224 = vmul.f32 %v220, 0.0625
        %v225 = vmul.f32 %v223, 0.0625
        %v226 = vsub.f32 %v212, %v224
        %v227 = vsub.f32 %v215, %v225
        %v228 = vmul.f32 %v226, %v226
        %v229 = vmul.f32 %v227, %v227
        %v230 = vsel %vm217, %v228, 0.0
        %231 = vadd.xlane.f32.xlu0 %v230
        %v232 = vpop.xlane.xlu0 %231
        %v233 = vsel %vm217, %v229, 0.0
        %234 = vadd.xlane.f32.xlu0 %v233
        %v235 = vpop.xlane.xlu0 %234
        %v236 = vmul.f32 %v232, 0.0625
        %v237 = vmul.f32 %v235, 0.0625
        %v238 = vadd.f32 %v236, 1e-05
        %v239 = vadd.f32 %v237, 1e-05
        %v240 = vrsqrt.pop %v238
        %v241 = vmul.f32 %v240, %v238
        %v242 = vmul.f32 %v241, %v240
        %v243 = vmul.f32 0.5, %v242
        %v244 = vsub.f32 1.5, %v243
        %v245 = vmul.f32 %v240, %v244
        %vm246 = vweird.f32 %v238
        %vm247 = vweird.f32 %v240
        %vm248 = vmor %vm246, %vm247
        %v249 = vsel %vm248, %v240, %v245
        %v250 = vrsqrt.pop %v239
        %v251 = vmul.f32 %v250, %v239
        %v252 = vmul.f32 %v251, %v250
        %v253 = vmul.f32 0.5, %v252
        %v254 = vsub.f32 1.5, %v253
        %v255 = vmul.f32 %v250, %v254
        %vm256 = vweird.f32 %v239
        %vm257 = vweird.f32 %v250
        %vm258 = vmor %vm256, %vm257
        %v259 = vsel %vm258, %v250, %v255
        %v260 = vmul.f32 %v226, %v249
        %v261 = vmul.f32 %v227, %v259
        %v262 = vsub.f32 0.0, %v261
        %v263 = vmul.f32 %v262, 1.442695
        %v264 = vpow.pop %v263
        %v265 = vadd.f32 %v264, 1.0
        %v266 = vrcp.pop %v265
        %v267 = vmul.f32 %v260, %v266
        %v268 = vld [vmem:[%s2] sm:$0xf]
        %270 = vrot.lane.b32.xlu0 %v267, 1
        %v271 = vpop.permute.xlu0 %270
        %v273 = vsel %vm173, 0.0, %v271
        %274 = vrot.lane.b32.xlu0 %v267, 127
        %v275 = vpop.permute.xlu0 %274
        %v277 = vsel %vm178, %v275, 0.0
        %vm278 = vcmask 195584
        %v280 = vsel %vm278, %v268, 0
        %282 = vmatpush.msra.mxu0 0.0
        %283 = vmatpush.msra.mxu0 0.0
        %284 = vmatpush.msra.mxu0 0.0
        %285 = vmatpush.msra.mxu0 0.0
        %286 = vmatpush.msra.mxu0 0.0
        %287 = vmatpush.msra.mxu0 0.0
        %288 = vmatpush.msra.mxu0 0.0
        %289 = vmatpush.msra.mxu0 0.0
        %290 = vmatpush.msra.mxu0 0.0
        %291 = vmatpush.msra.mxu0 0.0
        %292 = vmatpush.msra.mxu0 0.0
        %293 = vmatpush.msra.mxu0 0.0
        %294 = vmatpush.msra.mxu0 0.0
        %295 = vmatpush.msra.mxu0 %v277
        %296 = vmatpush.msra.mxu0 %v267
        %297 = vmatpush.msra.mxu0 %v273
        %298 = vmatmul.f32.gmra.mxu0 %v280
        %v299 = vpop.f32.mrf.mxu0
        %v300 = vadd.f32 0.0, %v299
        %301 = vdwg.mxu0
        %vm302 = vcmask 125952
        %v303 = vsel %vm302, %v300, 0.0
        %304 = vadd.xlane.f32.xlu0 %v303
        %v305 = vpop.xlane.xlu0 %304
        %v306 = vmul.f32 %v305, 0.0625
        %v307 = vsub.f32 %v300, %v306
        %v308 = vmul.f32 %v307, %v307
        %v309 = vsel %vm302, %v308, 0.0
        %310 = vadd.xlane.f32.xlu0 %v309
        %v311 = vpop.xlane.xlu0 %310
        %v312 = vmul.f32 %v311, 0.0625
        %v313 = vadd.f32 %v312, 1e-05
        %v314 = vrsqrt.pop %v313
        %v315 = vmul.f32 %v314, %v313
        %v316 = vmul.f32 %v315, %v314
        %v317 = vmul.f32 0.5, %v316
        %v318 = vsub.f32 1.5, %v317
        %v319 = vmul.f32 %v314, %v318
        %vm320 = vweird.f32 %v313
        %vm321 = vweird.f32 %v314
        %vm322 = vmor %vm320, %vm321
        %v323 = vsel %vm322, %v314, %v319
        %v324 = vmul.f32 %v307, %v323
        %v325 = vadd.f32 %v166, %v324
        %326 = vst.msk [vmem:[%s161] sm:$0xf] %vm302, %v325
        %s327 = sand.u32 %s93, 1
        %s328 = scalar_lea.sflag [#allocation3], %s327
        %s329 = sand.u32 %s93, 1
        %s330 = smul.addr %s329, 4
        %s331 = scalar_lea.vmem [#allocation2], %s330
        // Predicated region
        $region33: #{residual_block.1} parent=31 // pred_check
          %p332 = pneg %p103
        $region34: #{residual_block.1} parent=31 // pred_check_branch
          %334 = sbr.rel (%p332) target = $region36
        $region35: #{residual_block.1} parent=31 // pred_region
          %336 = vsyncadd %s328, 0
          %s337 = smul.addr %s17, 4
          %s338 = scalar_lea.hbm %s3, %s337
          %s340 = sshll.u32 %s331, 4
          %s341 = int_to_ptr.vmem [resolvable:$true] %s340
          %s342 = sshll.u32 %s338, 4
          %s343 = int_to_ptr.hbm [resolvable:$true] %s342
          %345 = dma.vmem_to_hbm [thread:$0]  %s341, 64, %s343, %s328
        $region36: #{residual_block.1} parent=31 // pred_fallthru
          _
      $region32: #{residual_block.1} parent=5 // pred_fallthru
        _
      %p346 = scmp.le.s32.totalorder 2, %s12
      // Predicated region
      $region37: #{residual_block.1} parent=5 // pred_check
        %p347 = pneg %p346
      $region38: #{residual_block.1} parent=5 // pred_check_branch
        %349 = sbr.rel (%p347) target = $region40
      $region39: #{residual_block.1} parent=5 // pred_region
        %s350 = ssub.s32 %s12, 2
        // Predicated region
        $region41: #{residual_block.1} parent=39 // pred_check
          %p351 = pneg %p109
        $region42: #{residual_block.1} parent=39 // pred_check_branch
          %353 = sbr.rel (%p351) target = $region44
        $region43: #{residual_block.1} parent=39 // pred_region
          %s354 = sand.u32 %s94, 1
          %s355 = scalar_lea.sflag [#allocation3], %s354
          %s356 = sand.u32 %s94, 1
          %s357 = smul.addr %s356, 4
          %s358 = scalar_lea.vmem [#allocation2], %s357
          %360 = dma.done %s355, 64
        $region44: #{residual_block.1} parent=39 // pred_fallthru
          _
      $region40: #{residual_block.1} parent=5 // pred_fallthru
        _
    $region6: #{residual_block.1} parent=1 // loop_footer
      %s16 = sadd.s32 1, %s12
    $region7: #{residual_block.1} parent=1 // loop_footer_branch
      %11 = sbr.rel target = $region3
    $region8: #{residual_block.1} parent=1 // loop_exit
      _
    %361 = vsyncpa [#allocation3], 1
    %s362 = scalar_lea.sflag [#allocation3], 1
    %363 = vsyncpa %s362, 1

</llo_original>
